<compile_context>
chip_gen: v7x
topology: tpu7x:2x2x1
jax: 0.10.0
libtpu: 0.0.40
codegen_flags: <defaults>
</compile_context>

<pallas_src>
import functools

import jax
import jax.numpy as jnp
from jax.experimental import pallas as pl
from jax.experimental.pallas import tpu as pltpu


def _round_up(x, m):
    return ((x + m - 1) // m) * m


def _pick_tm(batch, cap=512):
    """Largest multiple of 16 that divides `batch`, <= cap, keeping grid >= 2."""
    cap = min(cap, batch)
    if batch >= 32:
        cap = min(cap, batch // 2)   # keep >= 2 grid steps for v7x's 2 TCs
    best = None
    t = 16
    while t <= cap:
        if batch % t == 0:
            best = t
        t += 16
    return best if best is not None else batch


def shared_linear_kernel(x_ref, wt_ref, b_ref, o_ref, *, h_valid):
    x = x_ref[...]                                    # [tm, Inp] bf16 (MXU LHS)
    wt = wt_ref[...]                                  # [Inp, Hp] bf16 (resident RHS)
    b = b_ref[...].astype(jnp.float32)                # [1, Hp]   f32

    # linear1: bf16 x bf16 -> f32 accumulation on the MXU, bias add in f32.
    h1 = jnp.dot(x, wt, preferred_element_type=jnp.float32) + b    # [tm, Hp] f32

    # LayerNorm over the valid hidden width (padded columns of h1 are exactly
    # zero, so full-width sums equal valid-width sums).  One-pass variance.
    inv_h = 1.0 / h_valid
    mean = jnp.sum(h1, axis=-1, keepdims=True) * inv_h
    ex2 = jnp.sum(h1 * h1, axis=-1, keepdims=True) * inv_h
    var = ex2 - mean * mean
    h1n = (h1 - mean) * jax.lax.rsqrt(var + 1e-5)

    # Scale by 0.5, cast to bf16 and reuse the SAME resident wT (no bias).
    # Garbage in padded columns of h1s is harmless: the corresponding wT rows
    # are zero, so they contribute nothing to the contraction.
    h1s = (h1n * 0.5).astype(jnp.bfloat16)                          # [tm, Hp] bf16
    h2 = jnp.dot(h1s, wt, preferred_element_type=jnp.float32)       # [tm, Hp] f32

    o_ref[...] = h2.astype(o_ref.dtype)


def shared_weights_forward(x, w, b, *, tm=None):
    """x: [B, In] bf16, w: [H, In] bf16 (shared), b: [H] bf16 -> [B, H] bf16."""
    B, In = x.shape
    H, In_w = w.shape
    assert In_w == In, "weight inner dim must match input feature dim"
    # linear2 reuses the shared W on a [., H] activation, so the module is only
    # well-typed when hidden_size == input_size (as in the PyTorch test).
    assert H == In, "shared-weight reuse requires hidden_size == input_size"

    if tm is None:
        tm = _pick_tm(B)
    assert B % tm == 0, f"batch ({B}) must be divisible by the batch tile ({tm})"

    # Lane-dense padding: pad feature dims to multiples of 128 so loads/stores
    # are unmasked and the MXU sees full-width tiles.
    Inp = _round_up(In, 128)
    Hp = _round_up(H, 128)

    x_p = x if Inp == In else jnp.pad(x, ((0, 0), (0, Inp - In)))
    wt = w.T                                   # one-time HBM transpose: [In, H]
    wt_p = wt if (Inp == In and Hp == H) else jnp.pad(
        wt, ((0, Inp - In), (0, Hp - H)))
    b_p = (b if Hp == H else jnp.pad(b, (0, Hp - H))).reshape(1, Hp)

    kernel = functools.partial(shared_linear_kernel, h_valid=H)

    # VMEM budget: resident wT + bias (single-buffered) + double-buffered
    # x / out tiles + f32 LayerNorm temporaries, with 2x headroom.
    vmem_bytes = (Inp * Hp * 2 + Hp * 2
                  + 2 * tm * Inp * 2 + 2 * tm * Hp * 2
                  + 4 * tm * Hp * 4)
    vmem_limit = int(min(64 << 20, max(16 << 20, 2 * vmem_bytes)))

    out_p = pl.pallas_call(
        kernel,
        out_shape=jax.ShapeDtypeStruct((B, Hp), jnp.bfloat16),
        grid_spec=pltpu.PrefetchScalarGridSpec(
            num_scalar_prefetch=0,
            grid=(B // tm,),
            in_specs=[
                # x: tiled over batch -> double-buffered by the auto-pipeliner.
                pl.BlockSpec((tm, Inp), lambda i: (i, 0)),
                # wT: constant block index -> VMEM-resident; single-buffered.
                pl.BlockSpec((Inp, Hp), lambda i: (0, 0),
                             pipeline_mode=pl.Buffered(1)),
                # bias: resident, single-buffered.
                pl.BlockSpec((1, Hp), lambda i: (0, 0),
                             pipeline_mode=pl.Buffered(1)),
            ],
            out_specs=pl.BlockSpec((tm, Hp), lambda i: (i, 0)),
        ),
        compiler_params=pltpu.CompilerParams(
            # Batch tiles are independent -> shardable across v7x's 2 TCs.
            dimension_semantics=("parallel",),
            vmem_limit_bytes=vmem_limit,
        ),
    )(x_p, wt_p, b_p)

    return out_p[:, :H]


def reference_forward(x, w, b):
    """Pure-JAX reference (bf16 operands, f32 accumulation, two-pass LN)."""
    dn = (((1,), (1,)), ((), ()))   # contract last axes: x @ W^T
    h1 = jax.lax.dot_general(
        x, w, dimension_numbers=dn,
        preferred_element_type=jnp.float32) + b.astype(jnp.float32)
    mean = h1.mean(-1, keepdims=True)
    var = ((h1 - mean) ** 2).mean(-1, keepdims=True)
    h1n = (h1 - mean) * jax.lax.rsqrt(var + 1e-5)
    h1s = (h1n * 0.5).astype(jnp.bfloat16)
    h2 = jax.lax.dot_general(
        h1s, w, dimension_numbers=dn,
        preferred_element_type=jnp.float32)
    return h2.astype(jnp.bfloat16)


if __name__ == "__main__":
    # Module defaults: input_size = hidden_size = 64 (shared-weight reuse
    # requires them equal).  batch=32 with tm=16 -> grid=(2,), so the batch
    # tiling actually iterates and both v7x TensorCores get a tile.
    input_size, hidden_size = 64, 64
    batch = 32

    key = jax.random.PRNGKey(0)
    kx, kw, kb = jax.random.split(key, 3)

    x = jax.random.normal(kx, (batch, input_size), dtype=jnp.float32).astype(jnp.bfloat16)
    shared_w = jax.random.normal(kw, (hidden_size, input_size), dtype=jnp.float32).astype(jnp.bfloat16)
    bias = jax.random.normal(kb, (hidden_size,), dtype=jnp.float32).astype(jnp.bfloat16)

    out = shared_weights_forward(x, shared_w, bias)
    out = jax.block_until_ready(out)
    assert out.shape == (batch, hidden_size)
    assert out.dtype == jnp.bfloat16

    ref = reference_forward(x, shared_w, bias)
    diff = out.astype(jnp.float32) - ref.astype(jnp.float32)
    max_err = float(jnp.max(jnp.abs(diff)))
    rel_err = float(jnp.linalg.norm(diff) / (jnp.linalg.norm(ref.astype(jnp.float32)) + 1e-6))
    # Tolerances account for bf16 rounding of h1s / h2 (|h2| can reach ~15,
    # bf16 ulp ~0.06) and the one-pass vs two-pass variance path.
    assert max_err < 0.25, f"max abs err too large: {max_err}"
    assert rel_err < 0.02, f"relative err too large: {rel_err}"

    print("KERNEL_OK")
</pallas_src>

<mosaic_0001>
module attributes {stable_mosaic.version = 11 : i64} {
  func.func @shared_linear_kernel(%arg0: i32, %arg1: memref<16x128xbf16, #tpu.memory_space<vmem>>, %arg2: memref<128x128xbf16, #tpu.memory_space<vmem>>, %arg3: memref<1x128xbf16, #tpu.memory_space<vmem>>, %arg4: memref<16x128xbf16, #tpu.memory_space<vmem>>) attributes {dimension_semantics = [#tpu.dimension_semantics<parallel>], iteration_bounds = array<i64: 2>, scalar_prefetch = 0 : i64, scratch_operands = 0 : i64, tpu.core_type = #tpu.core_type<tc>, window_params = [{transform_indices = @transform_0, window_bounds = array<i64: 16, 128>}, {pipeline_mode = #tpu.pipeline_mode<synchronous>, transform_indices = @transform_1, window_bounds = array<i64: 128, 128>}, {pipeline_mode = #tpu.pipeline_mode<synchronous>, transform_indices = @transform_2, window_bounds = array<i64: 1, 128>}, {transform_indices = @transform_3, window_bounds = array<i64: 16, 128>}]} {
    %c0 = arith.constant 0 : index
    %c0_0 = arith.constant 0 : index
    %0 = vector.load %arg1[%c0, %c0_0] : memref<16x128xbf16, #tpu.memory_space<vmem>>, vector<16x128xbf16>
    %c0_1 = arith.constant 0 : index
    %c0_2 = arith.constant 0 : index
    %1 = vector.load %arg2[%c0_1, %c0_2] : memref<128x128xbf16, #tpu.memory_space<vmem>>, vector<128x128xbf16>
    %c0_3 = arith.constant 0 : index
    %c0_4 = arith.constant 0 : index
    %2 = vector.load %arg3[%c0_3, %c0_4] : memref<1x128xbf16, #tpu.memory_space<vmem>>, vector<1x128xbf16>
    %3 = arith.extf %2 : vector<1x128xbf16> to vector<1x128xf32>
    %cst = arith.constant dense<0.000000e+00> : vector<16x128xf32>
    %4 = tpu.matmul %0, %1, %cst {dimension_numbers = #tpu.dot_dimension_numbers<[1], [0], [0], [1], [0, 0, 1, 1], [], []>} : vector<16x128xbf16>, vector<128x128xbf16>, vector<16x128xf32> -> vector<16x128xf32>
    %5 = vector.broadcast %3 : vector<1x128xf32> to vector<16x128xf32>
    %6 = arith.addf %4, %5 : vector<16x128xf32>
    %cst_5 = arith.constant dense<0.000000e+00> : vector<16xf32>
    %7 = vector.multi_reduction <add>, %6, %cst_5 [1] : vector<16x128xf32> to vector<16xf32>
    %8 = vector.shape_cast %7 : vector<16xf32> to vector<16x1xf32>
    %cst_6 = arith.constant 1.562500e-02 : f32
    %9 = vector.broadcast %cst_6 : f32 to vector<16x1xf32>
    %10 = arith.mulf %8, %9 : vector<16x1xf32>
    %11 = arith.mulf %6, %6 : vector<16x128xf32>
    %cst_7 = arith.constant dense<0.000000e+00> : vector<16xf32>
    %12 = vector.multi_reduction <add>, %11, %cst_7 [1] : vector<16x128xf32> to vector<16xf32>
    %13 = vector.shape_cast %12 : vector<16xf32> to vector<16x1xf32>
    %cst_8 = arith.constant 1.562500e-02 : f32
    %14 = vector.broadcast %cst_8 : f32 to vector<16x1xf32>
    %15 = arith.mulf %13, %14 : vector<16x1xf32>
    %16 = arith.mulf %10, %10 : vector<16x1xf32>
    %17 = arith.subf %15, %16 : vector<16x1xf32>
    %18 = vector.broadcast %10 : vector<16x1xf32> to vector<16x128xf32>
    %19 = arith.subf %6, %18 : vector<16x128xf32>
    %cst_9 = arith.constant 9.99999974E-6 : f32
    %20 = vector.broadcast %cst_9 : f32 to vector<16x1xf32>
    %21 = arith.addf %17, %20 : vector<16x1xf32>
    %22 = math.rsqrt %21 : vector<16x1xf32>
    %23 = vector.broadcast %22 : vector<16x1xf32> to vector<16x128xf32>
    %24 = arith.mulf %19, %23 : vector<16x128xf32>
    %cst_10 = arith.constant 5.000000e-01 : f32
    %25 = vector.broadcast %cst_10 : f32 to vector<16x128xf32>
    %26 = arith.mulf %24, %25 : vector<16x128xf32>
    %27 = arith.truncf %26 : vector<16x128xf32> to vector<16x128xbf16>
    %cst_11 = arith.constant dense<0.000000e+00> : vector<16x128xf32>
    %28 = tpu.matmul %27, %1, %cst_11 {dimension_numbers = #tpu.dot_dimension_numbers<[1], [0], [0], [1], [0, 0, 1, 1], [], []>} : vector<16x128xbf16>, vector<128x128xbf16>, vector<16x128xf32> -> vector<16x128xf32>
    %29 = arith.truncf %28 : vector<16x128xf32> to vector<16x128xbf16>
    %c0_12 = arith.constant 0 : index
    %c0_13 = arith.constant 0 : index
    %30 = vector.load %arg4[%c0_12, %c0_13] : memref<16x128xbf16, #tpu.memory_space<vmem>>, vector<16x128xbf16>
    tpu.vector_store %arg4[%c0_12, %c0_13], %29 {strides = array<i32>} : memref<16x128xbf16, #tpu.memory_space<vmem>>, vector<16x128xbf16>,
    return
  }
  func.func @transform_0(%arg0: i32) -> (i32, i32) {
    %c0_i32 = arith.constant 0 : i32
    %c0_i32_0 = arith.constant 0 : i32
    return %arg0, %c0_i32 : i32, i32
  }
  func.func @transform_1(%arg0: i32) -> (i32, i32) {
    %c0_i32 = arith.constant 0 : i32
    %c0_i32_0 = arith.constant 0 : i32
    %c0_i32_1 = arith.constant 0 : i32
    return %c0_i32, %c0_i32_0 : i32, i32
  }
  func.func @transform_2(%arg0: i32) -> (i32, i32) {
    %c0_i32 = arith.constant 0 : i32
    %c0_i32_0 = arith.constant 0 : i32
    %c0_i32_1 = arith.constant 0 : i32
    return %c0_i32, %c0_i32_0 : i32, i32
  }
  func.func @transform_3(%arg0: i32) -> (i32, i32) {
    %c0_i32 = arith.constant 0 : i32
    %c0_i32_0 = arith.constant 0 : i32
    return %arg0, %c0_i32 : i32, i32
  }
}

</mosaic_0001>

<llo_original>
// kernel: tpu_custom_call.1
$region0: #{tpu_custom_call.1}
  #allocation0 [shape = 'u32[]', space=smem, size = 0x4, offset = 0x4, fixed_abs, tag = 'smem constant byte address 0x4 - core index']
  #allocation1 [shape = 'u32[144,128]{1,0:T(1,128)}', space=vmem, size = 0x12000, scoped, tag = 'internal scratch']
  %s0 = inlined_call_operand.hbm [shape: bf16[32,128], index: 0, kind: input, shape index: {}]
  %s1 = inlined_call_operand.hbm [shape: bf16[128,128], index: 1, kind: input, shape index: {}]
  %s2 = inlined_call_operand.vmem [shape: bf16[1,128], index: 2, kind: input, shape index: {}]
  %s3 = inlined_call_operand.hbm [shape: bf16[32,128], index: 3, kind: output, shape index: {}]
  %s4 = sld [smem:[#allocation0]]
  $region53: #{tpu_custom_call.1} parent=0
    _
  %s6 = ssub.s32 1, %s4
  %s7 = scalar_select 0, %s6, %s4
  $region1: #{tpu_custom_call.1} parent=0
    #allocation2 [shape = 'u8[8192]{0}', space=vmem, size = 0x2000, scoped, tag = 'input window, operand 0']
    #allocation3 [shape = 's32[2]{0}', space=sflag, size = 0x8, scoped, tag = 'scoped memory for tpu_custom_call.1']
    #allocation4 [shape = 's32[2]{0}', space=sflag, size = 0x8, scoped, tag = 'scoped memory for tpu_custom_call.1']
    #allocation5 [shape = 'u8[32768]{0}', space=vmem, size = 0x8000, scoped, tag = 'input window, operand 1, single buffered']
    #allocation6 [shape = 's32[1]{0}', space=sflag, size = 0x4, scoped, tag = 'scoped memory for tpu_custom_call.1']
    #allocation7 [shape = 'u8[8192]{0}', space=vmem, size = 0x2000, scoped, tag = 'output window, operand 0']
    %8 = vsyncpa [#allocation3], 0
    %s9 = scalar_lea.sflag [#allocation3], 1
    %10 = vsyncpa %s9, 0
    %11 = vsyncpa [#allocation6], 0
    %12 = vsyncpa [#allocation4], 0
    %s13 = scalar_lea.sflag [#allocation4], 1
    %14 = vsyncpa %s13, 0
    loop: start=0, step=1, limit=4
    $region2: #{tpu_custom_call.1} parent=1 // loop_pre_header
      _
    $region3: #{tpu_custom_call.1} parent=1 // loop_header
      %s16 = sphi 0, %s20
      %p17 = scmp.ge.s32.totalorder %s16, 4
      %s26 = sphi 0, %s28
      %s29 = sphi 0, %s26
      %s30 = sphi 0, %s29
      %s46 = sphi 0, %s30
      %s50 = sphi 0, %s50
      %s52 = sphi 0, %s50
      %s53 = sphi 0, %s52
      %s67 = sphi 0, %s53
      %s71 = sphi 0, %s71
      %s73 = sphi 0, %s71
      %s74 = sphi 0, %s73
      %s88 = sphi 0, %s74
      %s94 = sphi 0, %s96
      %s97 = sphi 0, %s94
      %s98 = sphi 0, %s97
      %s114 = sphi 0, %s98
    $region4: #{tpu_custom_call.1} parent=1 // loop_header_branch
      %19 = sbr.rel (%p17) target = $region8
    $region5: #{tpu_custom_call.1} parent=1 // loop_body
      %s21 = ssub.s32 %s16, 1
      %s22 = ssub.s32 %s16, 2
      %s23 = sadd.s32 %s16, 1
      %s24 = ssub.s32 %s16, %s23
      %p25 = scmp.eq.s32.totalorder %s24, 0
      %s27 = sadd.s32 %s26, 1
      %s28 = scalar_select %p25, %s26, %s27
      %p31 = pneg %p25
      %p32 = scmp.eq.s32.totalorder %s16, 1
      %p33 = por %p31, %p32
      %p34 = scmp.ne.s32.totalorder %s26, %s29
      %p35 = scmp.eq.s32.totalorder %s16, 0
      %p36 = por %p34, %p35
      %p37 = scmp.ne.s32.totalorder %s26, %s29
      %p38 = scmp.eq.s32.totalorder %s21, 1
      %p39 = por %p37, %p38
      %p40 = scmp.ne.s32.totalorder %s29, %s30
      %p41 = scmp.eq.s32.totalorder %s21, 0
      %p42 = por %p40, %p41
      %p43 = scmp.ne.s32.totalorder %s29, %s30
      %p44 = scmp.eq.s32.totalorder %s22, 1
      %p45 = por %p43, %p44
      %p47 = scmp.ne.s32.totalorder %s30, %s46
      %p48 = scmp.eq.s32.totalorder %s22, 0
      %p49 = por %p47, %p48
      %s51 = sadd.s32 %s50, 1
      %p54 = scmp.eq.s32.totalorder %s16, 1
      %p55 = scmp.ne.s32.totalorder %s50, %s52
      %p56 = scmp.eq.s32.totalorder %s16, 0
      %p57 = por %p55, %p56
      %p58 = scmp.ne.s32.totalorder %s50, %s52
      %p59 = scmp.eq.s32.totalorder %s21, 1
      %p60 = por %p58, %p59
      %p61 = scmp.ne.s32.totalorder %s52, %s53
      %p62 = scmp.eq.s32.totalorder %s21, 0
      %p63 = por %p61, %p62
      %p64 = scmp.ne.s32.totalorder %s52, %s53
      %p65 = scmp.eq.s32.totalorder %s22, 1
      %p66 = por %p64, %p65
      %p68 = scmp.ne.s32.totalorder %s53, %s67
      %p69 = scmp.eq.s32.totalorder %s22, 0
      %p70 = por %p68, %p69
      %s72 = sadd.s32 %s71, 1
      %p75 = scmp.eq.s32.totalorder %s16, 1
      %p76 = scmp.ne.s32.totalorder %s71, %s73
      %p77 = scmp.eq.s32.totalorder %s16, 0
      %p78 = por %p76, %p77
      %p79 = scmp.ne.s32.totalorder %s71, %s73
      %p80 = scmp.eq.s32.totalorder %s21, 1
      %p81 = por %p79, %p80
      %p82 = scmp.ne.s32.totalorder %s73, %s74
      %p83 = scmp.eq.s32.totalorder %s21, 0
      %p84 = por %p82, %p83
      %p85 = scmp.ne.s32.totalorder %s73, %s74
      %p86 = scmp.eq.s32.totalorder %s22, 1
      %p87 = por %p85, %p86
      %p89 = scmp.ne.s32.totalorder %s74, %s88
      %p90 = scmp.eq.s32.totalorder %s22, 0
      %p91 = por %p89, %p90
      %s92 = ssub.s32 %s16, %s23
      %p93 = scmp.eq.s32.totalorder %s92, 0
      %s95 = sadd.s32 %s94, 1
      %s96 = scalar_select %p93, %s94, %s95
      %p99 = pneg %p93
      %p100 = scmp.eq.s32.totalorder %s16, 1
      %p101 = por %p99, %p100
      %p102 = scmp.ne.s32.totalorder %s94, %s97
      %p103 = scmp.eq.s32.totalorder %s16, 0
      %p104 = por %p102, %p103
      %p105 = scmp.ne.s32.totalorder %s94, %s97
      %p106 = scmp.eq.s32.totalorder %s21, 1
      %p107 = por %p105, %p106
      %p108 = scmp.ne.s32.totalorder %s97, %s98
      %p109 = scmp.eq.s32.totalorder %s21, 0
      %p110 = por %p108, %p109
      %p111 = scmp.ne.s32.totalorder %s97, %s98
      %p112 = scmp.eq.s32.totalorder %s22, 1
      %p113 = por %p111, %p112
      %p115 = scmp.ne.s32.totalorder %s98, %s114
      %p116 = scmp.eq.s32.totalorder %s22, 0
      %p117 = por %p115, %p116
      %p118 = scmp.le.s32.totalorder 1, %s16
      %p119 = scmp.lt.s32.totalorder %s16, 3
      %p120 = pnand %p118, %p119
      %p121 = pneg %p120
      // Predicated region
      $region9: #{tpu_custom_call.1} parent=5 // pred_check
        _
      $region10: #{tpu_custom_call.1} parent=5 // pred_check_branch
        %123 = sbr.rel (%p120) target = $region12
      $region11: #{tpu_custom_call.1} parent=5 // pred_region
        %s124 = ssub.s32 %s16, 1
        // Predicated region
        $region13: #{tpu_custom_call.1} parent=11 // pred_check
          %p125 = pneg %p63
        $region14: #{tpu_custom_call.1} parent=11 // pred_check_branch
          %127 = sbr.rel (%p125) target = $region16
        $region15: #{tpu_custom_call.1} parent=11 // pred_region
          %s129 = ssub.s32 1024, 1024
          %130 = vsyncadd [#allocation6], %s129
          %s131 = sshll.u32 [#allocation5], 4
          %s132 = int_to_ptr.vmem [resolvable:$true] %s131
          %137 = dma.hbm_to_vmem [thread:$0]  %s1, 1024, %s132, [#allocation6], 64, 64, 4
        $region16: #{tpu_custom_call.1} parent=11 // pred_fallthru
          _
        // Predicated region
        $region17: #{tpu_custom_call.1} parent=11 // pred_check
          %p138 = pneg %p84
        $region18: #{tpu_custom_call.1} parent=11 // pred_check_branch
          %140 = sbr.rel (%p138) target = $region20
        $region19: #{tpu_custom_call.1} parent=11 // pred_region
          _
        $region20: #{tpu_custom_call.1} parent=11 // pred_fallthru
          _
      $region12: #{tpu_custom_call.1} parent=5 // pred_fallthru
        _
      %p141 = scmp.lt.s32.totalorder %s16, 2
      // Predicated region
      $region21: #{tpu_custom_call.1} parent=5 // pred_check
        %p142 = pneg %p141
      $region22: #{tpu_custom_call.1} parent=5 // pred_check_branch
        %144 = sbr.rel (%p142) target = $region24
      $region23: #{tpu_custom_call.1} parent=5 // pred_region
        // Predicated region
        $region25: #{tpu_custom_call.1} parent=23 // pred_check
          %p145 = pneg %p36
        $region26: #{tpu_custom_call.1} parent=23 // pred_check_branch
          %147 = sbr.rel (%p145) target = $region28
        $region27: #{tpu_custom_call.1} parent=23 // pred_region
          %s148 = sand.u32 %s26, 1
          %s149 = scalar_lea.sflag [#allocation3], %s148
          %s150 = sand.u32 %s26, 1
          %s151 = smul.addr %s150, 8
          %s152 = scalar_lea.vmem [#allocation2], %s151
          %s153 = smul.u32 2, %s16
          %s155 = ssub.s32 128, 128
          %156 = vsyncadd %s149, %s155
          %s157 = smul.addr %s153, 64
          %s158 = scalar_lea.hbm %s0, %s157
          %s159 = sshll.u32 %s152, 4
          %s160 = int_to_ptr.vmem [resolvable:$true] %s159
          %165 = dma.hbm_to_vmem [thread:$0]  %s158, 128, %s160, %s149, 64, 64, 4
        $region28: #{tpu_custom_call.1} parent=23 // pred_fallthru
          _
      $region24: #{tpu_custom_call.1} parent=5 // pred_fallthru
        _
      %p166 = scmp.le.s32.totalorder 1, %s16
      %p167 = scmp.lt.s32.totalorder %s16, 3
      %p168 = pnand %p166, %p167
      %p169 = pneg %p168
      // Predicated region
      $region29: #{tpu_custom_call.1} parent=5 // pred_check
        _
      $region30: #{tpu_custom_call.1} parent=5 // pred_check_branch
        %171 = sbr.rel (%p168) target = $region32
      $region31: #{tpu_custom_call.1} parent=5 // pred_region
        %s172 = ssub.s32 %s16, 1
        %s173 = sand.u32 %s29, 1
        %s174 = scalar_lea.sflag [#allocation3], %s173
        %s175 = sand.u32 %s29, 1
        %s176 = smul.addr %s175, 8
        %s177 = scalar_lea.vmem [#allocation2], %s176
        // Predicated region
        $region33: #{tpu_custom_call.1} parent=31 // pred_check
          %p178 = pneg %p42
        $region34: #{tpu_custom_call.1} parent=31 // pred_check_branch
          %180 = sbr.rel (%p178) target = $region36
        $region35: #{tpu_custom_call.1} parent=31 // pred_region
          %181 = dma.done %s174, 128
        $region36: #{tpu_custom_call.1} parent=31 // pred_fallthru
          _
        // Predicated region
        $region37: #{tpu_custom_call.1} parent=31 // pred_check
          %p182 = pneg %p63
        $region38: #{tpu_custom_call.1} parent=31 // pred_check_branch
          %184 = sbr.rel (%p182) target = $region40
        $region39: #{tpu_custom_call.1} parent=31 // pred_region
          %185 = dma.done [#allocation6], 1024
        $region40: #{tpu_custom_call.1} parent=31 // pred_fallthru
          _
        %s186 = sand.u32 %s29, 1
        %s187 = scalar_lea.sflag [#allocation3], %s186
        %s188 = sand.u32 %s29, 1
        %s189 = smul.addr %s188, 8
        %s190 = scalar_lea.vmem [#allocation2], %s189
        %p191 = pneg %p42
        %p192 = pneg %p39
        %p193 = pneg %p63
        %p194 = pneg %p60
        %p195 = pneg %p84
        %p196 = pneg %p81
        %p197 = pneg %p110
        %p198 = pneg %p107
        %s199 = sand.u32 %s97, 1
        %s200 = scalar_lea.sflag [#allocation4], %s199
        %s201 = sand.u32 %s97, 1
        %s202 = smul.addr %s201, 8
        %s203 = scalar_lea.vmem [#allocation7], %s202
        %s204 = smul.u32 2, %s21
        %s205 = smul.u32 2, %s21
        %v207 = vld [vmem:[%s177] sm:$0xf]
        %v208 = vld [vmem:[%s177 + $0x4] sm:$0xf]
        %v209 = vld [vmem:[#allocation5] sm:$0xf]
        %v210 = vld [vmem:[#allocation5 + $0x4] sm:$0xf]
        %v211 = vld [vmem:[#allocation5 + $0x8] sm:$0xf]
        %v212 = vld [vmem:[#allocation5 + $0xc] sm:$0xf]
        %v213 = vld [vmem:[#allocation5 + $0x10] sm:$0xf]
        %v214 = vld [vmem:[#allocation5 + $0x14] sm:$0xf]
        %v215 = vld [vmem:[#allocation5 + $0x18] sm:$0xf]
        %v216 = vld [vmem:[#allocation5 + $0x1c] sm:$0xf]
        %v217 = vld [vmem:[#allocation5 + $0x20] sm:$0xf]
        %v218 = vld [vmem:[#allocation5 + $0x24] sm:$0xf]
        %v219 = vld [vmem:[#allocation5 + $0x28] sm:$0xf]
        %v220 = vld [vmem:[#allocation5 + $0x2c] sm:$0xf]
        %v221 = vld [vmem:[#allocation5 + $0x30] sm:$0xf]
        %v222 = vld [vmem:[#allocation5 + $0x34] sm:$0xf]
        %v223 = vld [vmem:[#allocation5 + $0x38] sm:$0xf]
        %v224 = vld [vmem:[#allocation5 + $0x3c] sm:$0xf]
        %v225 = vld [vmem:[%s2] sm:$0x1]
        %v226 = vunpack.c.l.bf16 %v225
        %v227 = vlaneseq
        %v228 = vshrl.u32 %v227, 7
        %v229 = vsub.s32 0, %v228
        %v230 = vrot.slane %v226, %v229
        %v233 = vunpack.c.l.b16 %v207
        %v234 = vunpack.c.l.b16 %v208
        %v235 = vpack.c.b16 %v234, %v233
        %v253 = vunpack.c.l.b16 %v209
        %v254 = vunpack.c.l.b16 %v210
        %v255 = vunpack.c.l.b16 %v211
        %v256 = vunpack.c.l.b16 %v212
        %v257 = vunpack.c.l.b16 %v213
        %v258 = vunpack.c.l.b16 %v214
        %v259 = vunpack.c.l.b16 %v215
        %v260 = vunpack.c.l.b16 %v216
        %v261 = vunpack.c.l.b16 %v217
        %v262 = vunpack.c.l.b16 %v218
        %v263 = vunpack.c.l.b16 %v219
        %v264 = vunpack.c.l.b16 %v220
        %v265 = vunpack.c.l.b16 %v221
        %v266 = vunpack.c.l.b16 %v222
        %v267 = vunpack.c.l.b16 %v223
        %v268 = vunpack.c.l.b16 %v224
        %v269 = vpack.c.b16 %v254, %v253
        %v270 = vpack.c.b16 %v256, %v255
        %v271 = vpack.c.b16 %v258, %v257
        %v272 = vpack.c.b16 %v260, %v259
        %v273 = vpack.c.b16 %v262, %v261
        %v274 = vpack.c.b16 %v264, %v263
        %v275 = vpack.c.b16 %v266, %v265
        %v276 = vpack.c.b16 %v268, %v267
        %285 = vmatprep.subr.bf16.mxu0 0
        %286 = vmatpush1.bf16.msra.mxu0 %v269
        %287 = vmatprep.subr.bf16.mxu0 0
        %288 = vmatpush1.bf16.msra.mxu0 %v270
        %289 = vmatprep.subr.bf16.mxu0 0
        %290 = vmatpush1.bf16.msra.mxu0 %v271
        %291 = vmatprep.subr.bf16.mxu0 0
        %292 = vmatpush1.bf16.msra.mxu0 %v272
        %293 = vmatprep.subr.bf16.mxu0 0
        %294 = vmatpush1.bf16.msra.mxu0 %v273
        %295 = vmatprep.subr.bf16.mxu0 0
        %296 = vmatpush1.bf16.msra.mxu0 %v274
        %297 = vmatprep.subr.bf16.mxu0 0
        %298 = vmatpush1.bf16.msra.mxu0 %v275
        %299 = vmatprep.subr.bf16.mxu0 0
        %300 = vmatpush1.bf16.msra.mxu0 %v276
        %301 = vmatprep.subr.bf16.mxu0 0
        %302 = vmatpush1.bf16.msra.mxu0 0
        %303 = vmatprep.subr.bf16.mxu0 0
        %304 = vmatpush1.bf16.msra.mxu0 0
        %305 = vmatprep.subr.bf16.mxu0 0
        %306 = vmatpush1.bf16.msra.mxu0 0
        %307 = vmatprep.subr.bf16.mxu0 0
        %308 = vmatpush1.bf16.msra.mxu0 0
        %309 = vmatprep.subr.bf16.mxu0 0
        %310 = vmatpush1.bf16.msra.mxu0 0
        %311 = vmatprep.subr.bf16.mxu0 0
        %312 = vmatpush1.bf16.msra.mxu0 0
        %313 = vmatprep.subr.bf16.mxu0 0
        %314 = vmatpush1.bf16.msra.mxu0 0
        %315 = vmatprep.subr.bf16.mxu0 0
        %316 = vmatpush1.bf16.msra.mxu0 0
        %317 = vmatprep.mubr.bf16.mxu0 0
        %318 = vmatmul.mubr.bf16.gmra.mrb[0].mxu0 %v235
        %v319 = vpop.f32.mrb[0].mxu0
        %v320 = vadd.f32 %v230, %v319
        %v321 = vpop.f32.mrb[0].mxu0
        %v322 = vpop.f32.mrb[0].mxu0
        %v323 = vadd.f32 %v230, %v322
        %v324 = vpop.f32.mrb[0].mxu0
        %325 = vdwg.mxu0
        %326 = vadd.xlane.f32.xlu0 %v320
        %v327 = vpop.xlane.xlu0 %326
        %328 = vadd.xlane.f32.xlu0 %v323
        %v329 = vpop.xlane.xlu0 %328
        %v330 = vmul.f32 %v327, 0.015625
        %v331 = vmul.f32 %v329, 0.015625
        %v332 = vmul.f32 %v320, %v320
        %v333 = vmul.f32 %v323, %v323
        %334 = vadd.xlane.f32.xlu0 %v332
        %v335 = vpop.xlane.xlu0 %334
        %336 = vadd.xlane.f32.xlu0 %v333
        %v337 = vpop.xlane.xlu0 %336
        %v338 = vmul.f32 %v335, 0.015625
        %v339 = vmul.f32 %v337, 0.015625
        %v340 = vmul.f32 %v330, %v330
        %v341 = vmul.f32 %v331, %v331
        %v342 = vsub.f32 %v338, %v340
        %v343 = vsub.f32 %v339, %v341
        %v344 = vsub.f32 %v320, %v330
        %v345 = vsub.f32 %v323, %v331
        %v346 = vadd.f32 %v342, 1e-05
        %v347 = vadd.f32 %v343, 1e-05
        %v348 = vrsqrt.pop %v346
        %v349 = vrsqrt.pop %v347
        %v350 = vmul.f32 %v344, %v348
        %v351 = vmul.f32 %v345, %v349
        %v352 = vmul.f32 %v350, 0.5
        %v353 = vmul.f32 %v351, 0.5
        %v354 = vpack.c.bf16 %v353, %v352
        %355 = vmatprep.subr.bf16.mxu0 0
        %356 = vmatpush1.bf16.msra.mxu0 %v269
        %357 = vmatprep.subr.bf16.mxu0 0
        %358 = vmatpush1.bf16.msra.mxu0 %v270
        %359 = vmatprep.subr.bf16.mxu0 0
        %360 = vmatpush1.bf16.msra.mxu0 %v271
        %361 = vmatprep.subr.bf16.mxu0 0
        %362 = vmatpush1.bf16.msra.mxu0 %v272
        %363 = vmatprep.subr.bf16.mxu0 0
        %364 = vmatpush1.bf16.msra.mxu0 %v273
        %365 = vmatprep.subr.bf16.mxu0 0
        %366 = vmatpush1.bf16.msra.mxu0 %v274
        %367 = vmatprep.subr.bf16.mxu0 0
        %368 = vmatpush1.bf16.msra.mxu0 %v275
        %369 = vmatprep.subr.bf16.mxu0 0
        %370 = vmatpush1.bf16.msra.mxu0 %v276
        %371 = vmatprep.subr.bf16.mxu0 0
        %372 = vmatpush1.bf16.msra.mxu0 0
        %373 = vmatprep.subr.bf16.mxu0 0
        %374 = vmatpush1.bf16.msra.mxu0 0
        %375 = vmatprep.subr.bf16.mxu0 0
        %376 = vmatpush1.bf16.msra.mxu0 0
        %377 = vmatprep.subr.bf16.mxu0 0
        %378 = vmatpush1.bf16.msra.mxu0 0
        %379 = vmatprep.subr.bf16.mxu0 0
        %380 = vmatpush1.bf16.msra.mxu0 0
        %381 = vmatprep.subr.bf16.mxu0 0
        %382 = vmatpush1.bf16.msra.mxu0 0
        %383 = vmatprep.subr.bf16.mxu0 0
        %384 = vmatpush1.bf16.msra.mxu0 0
        %385 = vmatprep.subr.bf16.mxu0 0
        %386 = vmatpush1.bf16.msra.mxu0 0
        %387 = vmatprep.mubr.bf16.mxu0 0
        %388 = vmatmul.mubr.bf16.gmra.mrb[0].mxu0 %v354
        %v389 = vpop.f32.mrb[0].mxu0
        %v390 = vadd.f32 0.0, %v389
        %v391 = vpop.f32.mrb[0].mxu0
        %v392 = vpop.f32.mrb[0].mxu0
        %v393 = vadd.f32 0.0, %v392
        %v394 = vpop.f32.mrb[0].mxu0
        %395 = vdwg.mxu0
        %v396 = vpack.c.bf16 %v393, %v390
        %v398 = vunpack.c.l.b16 %v396
        %v399 = vunpack.c.h.b16 %v396
        %v400 = vpack.c.b16 %v398, %v398
        %v401 = vpack.c.b16 %v399, %v399
        %404 = vst [vmem:[%s203] sm:$0xf] %v400
        %405 = vst [vmem:[%s203 + $0x4] sm:$0xf] %v401
        %s406 = sand.u32 %s97, 1
        %s407 = scalar_lea.sflag [#allocation4], %s406
        %s408 = sand.u32 %s97, 1
        %s409 = smul.addr %s408, 8
        %s410 = scalar_lea.vmem [#allocation7], %s409
        // Predicated region
        $region41: #{tpu_custom_call.1} parent=31 // pred_check
          %p411 = pneg %p107
        $region42: #{tpu_custom_call.1} parent=31 // pred_check_branch
          %413 = sbr.rel (%p411) target = $region44
        $region43: #{tpu_custom_call.1} parent=31 // pred_region
          %s414 = smul.u32 2, %s21
          %s416 = ssub.s32 128, 128
          %417 = vsyncadd %s407, %s416
          %s418 = smul.addr %s414, 64
          %s419 = scalar_lea.hbm %s3, %s418
          %s420 = sshll.u32 %s410, 4
          %s421 = int_to_ptr.vmem [resolvable:$true] %s420
          %426 = dma.vmem_to_hbm [thread:$0]  %s421, 128, %s419, %s407, 64, 64, 4
        $region44: #{tpu_custom_call.1} parent=31 // pred_fallthru
          _
      $region32: #{tpu_custom_call.1} parent=5 // pred_fallthru
        _
      %p427 = scmp.le.s32.totalorder 2, %s16
      // Predicated region
      $region45: #{tpu_custom_call.1} parent=5 // pred_check
        %p428 = pneg %p427
      $region46: #{tpu_custom_call.1} parent=5 // pred_check_branch
        %430 = sbr.rel (%p428) target = $region48
      $region47: #{tpu_custom_call.1} parent=5 // pred_region
        %s431 = ssub.s32 %s16, 2
        // Predicated region
        $region49: #{tpu_custom_call.1} parent=47 // pred_check
          %p432 = pneg %p113
        $region50: #{tpu_custom_call.1} parent=47 // pred_check_branch
          %434 = sbr.rel (%p432) target = $region52
        $region51: #{tpu_custom_call.1} parent=47 // pred_region
          %s435 = sand.u32 %s98, 1
          %s436 = scalar_lea.sflag [#allocation4], %s435
          %s437 = sand.u32 %s98, 1
          %s438 = smul.addr %s437, 8
          %s439 = scalar_lea.vmem [#allocation7], %s438
          %440 = dma.done %s436, 128
        $region52: #{tpu_custom_call.1} parent=47 // pred_fallthru
          _
      $region48: #{tpu_custom_call.1} parent=5 // pred_fallthru
        _
    $region6: #{tpu_custom_call.1} parent=1 // loop_footer
      %s20 = sadd.s32 1, %s16
    $region7: #{tpu_custom_call.1} parent=1 // loop_footer_branch
      %15 = sbr.rel target = $region3
    $region8: #{tpu_custom_call.1} parent=1 // loop_exit
      _
    %441 = vsyncpa [#allocation3], 1
    %s442 = scalar_lea.sflag [#allocation3], 1
    %443 = vsyncpa %s442, 1
    %444 = vsyncpa [#allocation6], 1
    %445 = vsyncpa [#allocation4], 1
    %s446 = scalar_lea.sflag [#allocation4], 1
    %447 = vsyncpa %s446, 1

</llo_original>
